<compile_context>
chip_gen: v7x
topology: tpu7x:2x2x1
jax: 0.10.0
libtpu: 0.0.40
codegen_flags: <defaults>
</compile_context>

<pallas_src>
import jax
import jax.numpy as jnp
from jax.experimental import pallas as pl
from jax.experimental.pallas import tpu as pltpu


# ----------------------------------------------------------------------------- kernels
def _kron_matmul_kernel(x_ref, k_ref, b_ref, o_ref):
    """o = x @ K + b.   x: (g_rows, row_in), K: (row_in, row_out), b: (1, row_out)."""
    acc = jnp.dot(x_ref[...], k_ref[...], preferred_element_type=jnp.float32)
    o_ref[...] = (acc + b_ref[...]).astype(o_ref.dtype)


def _two_matmul_kernel(x_ref, w_ref, wt_ref, b_ref, o_ref):
    """o[g] = W^T @ x[g] @ W + b for each matrix in the block (static unroll)."""
    for g in range(x_ref.shape[0]):
        t = jnp.dot(x_ref[g], w_ref[...], preferred_element_type=jnp.float32)
        out = jnp.dot(wt_ref[...], t.astype(wt_ref.dtype),
                      preferred_element_type=jnp.float32)
        o_ref[g] = (out + b_ref[...]).astype(o_ref.dtype)


# ----------------------------------------------------------------------------- helpers
def _round_up(a, b):
    return -(-a // b) * b


def _round_down(a, b):
    return a // b * b


def _vmem_capacity_bytes():
    """Per-TensorCore VMEM; fall back to 64 MiB (v7x, the tightest generation)."""
    try:
        info = pltpu.get_tpu_info()
        cap = getattr(info, "vmem_capacity_bytes", None)
        if cap:
            return int(cap)
    except Exception:
        pass
    return 64 << 20


# ----------------------------------------------------------------------------- kron path
def _kron_forward(x, w_f32, bias_f32, dtype, sublane, vmem_cap, budget, k_budget):
    B, C, N, _ = x.shape
    _, M = w_f32.shape
    BC, nn, mm = B * C, N * N, M * M
    itemsize = dtype.itemsize

    # ---- lane-dense output layout (no masked vst.msk on the store path) -----
    # (a) exact packing: `pack` matrices per row so pack*mm == 128 (no pad, no
    #     trim) -- requires BC % pack == 0 and a modest block-diagonal K.
    # (b) otherwise: zero-pad K's columns up to a multiple of 128 and trim the
    #     extra lanes on the host afterwards.
    pack = 1
    mm_out = mm if mm % 128 == 0 else _round_up(mm, 128)
    if mm < 128 and 128 % mm == 0:
        p = 128 // mm
        if BC % p == 0 and p * p * nn * mm * itemsize <= k_budget:
            pack, mm_out = p, mm
    row_in, row_out = pack * nn, pack * mm_out
    rows = BC // pack

    # ---- kron(W, W) built in f32, cast ONCE; bias folded as a broadcast row --
    # K[i*N+j, a*M+b] = W[i,a] * W[j,b]  =>  vec(X) @ K = vec(W^T X W)
    k_single = jnp.kron(w_f32, w_f32)                       # (nn, mm) f32
    b_single = bias_f32.reshape(1, mm)
    if mm_out != mm:
        k_single = jnp.pad(k_single, ((0, 0), (0, mm_out - mm)))
        b_single = jnp.pad(b_single, ((0, 0), (0, mm_out - mm)))
    if pack > 1:
        k_single = jnp.kron(jnp.eye(pack, dtype=jnp.float32), k_single)
        b_single = jnp.tile(b_single, (1, pack))
    k_mat = k_single.astype(dtype)
    b_row = b_single.astype(dtype)
    k_bytes = k_mat.size * itemsize
    b_bytes = b_row.size * itemsize

    # ---- vec(X): pure reshapes of the contiguous input (no pad, no copy) -----
    x_rows = x.reshape(rows, row_in)

    # ---- row tiling against VMEM: double-buffered in/out blocks + constants --
    k_bufs = 1 if k_bytes > (1 << 20) else 2        # single-buffer a big K only
    bytes_per_row = 2 * (row_in + row_out) * itemsize
    avail = max(budget - k_bufs * (k_bytes + b_bytes), bytes_per_row * sublane)
    g_rows = min(avail // bytes_per_row,
                 (16 << 20) // ((row_in + row_out) * itemsize))   # per-step DMA cap
    if rows <= sublane:
        g_rows = rows                               # one full-array block (always legal)
    else:
        g_rows = max(sublane, _round_down(min(g_rows, rows), sublane))
    num_blocks = pl.cdiv(rows, g_rows)
    if num_blocks == 1 and rows >= 512:
        # v7x has two TensorCores: give the "parallel" grid >= 2 steps when each
        # half is still large enough to amortize the ~0.35us per-step overhead.
        g_rows = max(sublane, _round_up(pl.cdiv(rows, 2), sublane))
        num_blocks = pl.cdiv(rows, g_rows)

    working_set = (2 * g_rows * (row_in + row_out) * itemsize
                   + k_bufs * (k_bytes + b_bytes))
    vmem_limit = int(min(vmem_cap * 0.8, max(32 << 20, int(working_set * 1.5))))

    # Constant operands (index_map == (0, 0)) are single-buffered when big:
    # halves K's resident footprint, freeing VMEM for larger row blocks.
    const_mode = dict(pipeline_mode=pl.Buffered(1)) if k_bufs == 1 else {}
    in_specs = [
        pl.BlockSpec((g_rows, row_in), lambda i: (i, 0)),                  # vec(X) rows
        pl.BlockSpec((row_in, row_out), lambda i: (0, 0), **const_mode),   # kron(W, W)
        pl.BlockSpec((1, row_out), lambda i: (0, 0), **const_mode),        # bias row
    ]

    flops = 2 * rows * row_in * row_out
    bytes_accessed = (rows * (row_in + row_out) + k_mat.size + b_row.size) * itemsize

    out_rows = pl.pallas_call(
        _kron_matmul_kernel,
        out_shape=jax.ShapeDtypeStruct((rows, row_out), dtype),
        grid=(num_blocks,),
        in_specs=in_specs,
        out_specs=pl.BlockSpec((g_rows, row_out), lambda i: (i, 0)),
        compiler_params=pltpu.CompilerParams(
            dimension_semantics=("parallel",),
            vmem_limit_bytes=vmem_limit),
        cost_estimate=pl.CostEstimate(flops=int(flops), transcendentals=0,
                                      bytes_accessed=int(bytes_accessed)),
    )(x_rows, k_mat, b_row)

    if mm_out != mm:
        # Trim lane padding on the host (cheaper than masked partial stores
        # inside the HBM-bound kernel).
        out_rows = out_rows[:, :mm]
    return out_rows.reshape(BC, mm).reshape(B, C, M, M)


# ----------------------------------------------------------------------------- two-matmul path
def _two_matmul_forward(x, w_f32, bias_f32, dtype, vmem_cap):
    B, C, N, _ = x.shape
    _, M = w_f32.shape
    BC = B * C
    itemsize = dtype.itemsize

    w = w_f32.astype(dtype)
    wt = w_f32.T.astype(dtype)        # transposed on the host -> no in-kernel XLU pass
    b = bias_f32.astype(dtype)
    x_flat = x.reshape(BC, N, N)

    # A few matrices per grid step so per-step DMAs stay around >= 256 KiB.
    per_mat_bytes = (N * N + M * M) * itemsize
    G = max(1, min(8, (256 << 10) // max(per_mat_bytes, 1), BC))
    num_blocks = pl.cdiv(BC, G)

    working_set = (2 * G * per_mat_bytes
                   + 2 * (w.size + wt.size + b.size) * itemsize
                   + G * N * M * 4)                 # fp32 intermediate, rough
    vmem_limit = int(min(vmem_cap * 0.8, max(32 << 20, int(working_set * 1.5))))

    flops = 2 * BC * (N * N * M + N * M * M)
    bytes_accessed = (BC * (N * N + M * M) + 2 * N * M + M * M) * itemsize

    out = pl.pallas_call(
        _two_matmul_kernel,
        out_shape=jax.ShapeDtypeStruct((BC, M, M), dtype),
        grid=(num_blocks,),
        in_specs=[
            pl.BlockSpec((G, N, N), lambda i: (i, 0, 0)),
            pl.BlockSpec((N, M), lambda i: (0, 0)),
            pl.BlockSpec((M, N), lambda i: (0, 0)),
            pl.BlockSpec((M, M), lambda i: (0, 0)),
        ],
        out_specs=pl.BlockSpec((G, M, M), lambda i: (i, 0, 0)),
        compiler_params=pltpu.CompilerParams(
            dimension_semantics=("parallel",),
            vmem_limit_bytes=vmem_limit),
        cost_estimate=pl.CostEstimate(flops=int(flops), transcendentals=0,
                                      bytes_accessed=int(bytes_accessed)),
    )(x_flat, w, wt, b)
    return out.reshape(B, C, M, M)


# ----------------------------------------------------------------------------- public wrapper
def spd_bilinear_pallas(x, weight, bias=None, *, storage_dtype=None, mode="auto"):
    """output[b, c] = W^T @ x[b, c] @ W (+ bias).

    x: (B, C, N, N); weight: (N, M); bias: optional (M, M) constant term.
    storage_dtype: optional narrower dtype (e.g. jnp.bfloat16) for x/K/out;
      the MXU still accumulates in f32.  mode: "auto" | "kron" | "two_matmul".
    """
    B, C, N, N2 = x.shape
    assert N == N2, "input must be a batch of square (SPD) matrices"
    Nw, M = weight.shape
    assert Nw == N, "weight rows must match the matrix size"

    w_f32 = weight.astype(jnp.float32)
    bias_f32 = (jnp.zeros((M, M), jnp.float32) if bias is None
                else bias.astype(jnp.float32))

    dtype = jnp.dtype(storage_dtype) if storage_dtype is not None else jnp.dtype(x.dtype)
    x = x.astype(dtype)
    itemsize = dtype.itemsize
    sublane = max(8, 32 // itemsize)        # 8 rows f32, 16 bf16, 32 int8

    vmem_cap = _vmem_capacity_bytes()
    budget = int(vmem_cap * 0.45)           # pipeline working set; rest is headroom
    k_budget = min(8 << 20, budget // 3)    # most VMEM we let kron(W, W) claim

    nn, mm = N * N, M * M
    if mode == "auto":
        k_fits = nn * _round_up(mm, 128) * itemsize <= k_budget
        # kron does ~mm/2 FLOP per byte of X; keep it well under the MXU roofline.
        mem_bound = 2 * nn * mm <= 512 * (nn + mm) * itemsize
        mode = "kron" if (k_fits and mem_bound) else "two_matmul"

    if mode == "kron":
        return _kron_forward(x, w_f32, bias_f32, dtype, sublane,
                             vmem_cap, budget, k_budget)
    if mode == "two_matmul":
        return _two_matmul_forward(x, w_f32, bias_f32, dtype, vmem_cap)
    raise ValueError(f"unknown mode: {mode!r}")


def make_orthogonal_weight(key, input_size, output_size):
    """Deterministic stand-in for nn.init.orthogonal_ on an (in, out) matrix."""
    a = jax.random.normal(key, (input_size, output_size), dtype=jnp.float32)
    q, r = jnp.linalg.qr(a)
    s = jnp.sign(jnp.diag(r))
    s = jnp.where(s == 0, 1.0, s)
    return (q * s[None, :]).astype(jnp.float32)


class SPDTransformPallas:
    """Forward-pass mirror of the PyTorch SPDTransform module."""

    def __init__(self, input_size, output_size, key, *, storage_dtype=None):
        self.input_size = input_size
        self.output_size = output_size
        self.storage_dtype = storage_dtype
        self.has_increase = output_size > input_size
        weight_rows = output_size if self.has_increase else input_size
        self.weight = make_orthogonal_weight(key, weight_rows, output_size)

    def __call__(self, x, *, mode="auto"):
        if self.has_increase:
            # SPDIncreaseDim folded into the math (no padded tensor in HBM):
            #   X_pad = [[X, 0], [0, I]]  =>  W^T X_pad W = W1^T X W1 + W2^T W2
            w1 = self.weight[: self.input_size]
            w2 = self.weight[self.input_size:]
            bias = jnp.dot(w2.T, w2)
            return spd_bilinear_pallas(x, w1, bias,
                                       storage_dtype=self.storage_dtype, mode=mode)
        return spd_bilinear_pallas(x, self.weight,
                                   storage_dtype=self.storage_dtype, mode=mode)


def _reference(x, weight, input_size, output_size):
    """Literal (un-folded) reference: explicit SPDIncreaseDim + einsum."""
    out = x
    if output_size > input_size:
        padn = output_size - input_size
        out = jnp.pad(x, ((0, 0), (0, 0), (0, padn), (0, padn)))
        add = jnp.diag(jnp.concatenate(
            [jnp.zeros((input_size,), x.dtype), jnp.ones((padn,), x.dtype)]))
        out = out + add[None, None, :, :]
    return jnp.einsum('nm,bcnp,po->bcmo', weight, out, weight)


if __name__ == "__main__":
    key = jax.random.PRNGKey(0)
    k1, k2, k3, k4, k5 = jax.random.split(key, 5)

    def make_spd(k, B, C, N):
        a = jax.random.normal(k, (B, C, N, N), dtype=jnp.float32)
        return jnp.einsum('bcij,bckj->bcik', a, a) + 1e-3 * jnp.eye(N, dtype=jnp.float32)

    # Case 1: dimensionality reduction 16 -> 8 (kron path, exact lane packing).
    B, C, N, M = 2, 4, 16, 8
    x = make_spd(k1, B, C, N)
    mod = SPDTransformPallas(input_size=N, output_size=M, key=k2)
    y = jax.block_until_ready(mod(x))
    y_ref = _reference(x, mod.weight, N, M)
    assert y.shape == (B, C, M, M), y.shape
    assert jnp.allclose(y, y_ref, atol=2e-3, rtol=2e-3), "mismatch (reduce / kron)"

    # Case 2: dimensionality increase 8 -> 16 (folded SPDIncreaseDim, kron path).
    Ni, Mo = 8, 16
    x2 = make_spd(k3, B, C, Ni)
    mod2 = SPDTransformPallas(input_size=Ni, output_size=Mo, key=k4)
    y2 = jax.block_until_ready(mod2(x2))
    y2_ref = _reference(x2, mod2.weight, Ni, Mo)
    assert y2.shape == (B, C, Mo, Mo), y2.shape
    assert jnp.allclose(y2, y2_ref, atol=2e-3, rtol=2e-3), "mismatch (increase / kron)"

    # Case 3: per-matrix two-matmul fallback (the large-N / K-too-big path).
    y3 = jax.block_until_ready(mod(x, mode="two_matmul"))
    assert jnp.allclose(y3, y_ref, atol=2e-3, rtol=2e-3), "mismatch (two_matmul)"

    # Case 4: odd batch count -> column-padded lane-dense output + host trim.
    x4 = make_spd(k5, 1, 3, N)
    y4 = jax.block_until_ready(mod(x4))
    y4_ref = _reference(x4, mod.weight, N, M)
    assert y4.shape == (1, 3, M, M), y4.shape
    assert jnp.allclose(y4, y4_ref, atol=2e-3, rtol=2e-3), "mismatch (odd batch)"

    # Case 5: bf16 storage (half the HBM traffic; MXU still accumulates in f32).
    mod_bf = SPDTransformPallas(input_size=N, output_size=M, key=k2,
                                storage_dtype=jnp.bfloat16)
    y5 = jax.block_until_ready(mod_bf(x))
    assert y5.dtype == jnp.bfloat16
    assert jnp.allclose(y5.astype(jnp.float32), y_ref, atol=0.5, rtol=0.05), \
        "mismatch (bf16 storage)"

    print("KERNEL_OK")
</pallas_src>

<mosaic_0001>
module attributes {stable_mosaic.version = 11 : i64} {
  func.func @_kron_matmul_kernel(%arg0: i32, %arg1: memref<4x512xf32, #tpu.memory_space<vmem>>, %arg2: memref<512x128xf32, #tpu.memory_space<vmem>>, %arg3: memref<1x128xf32, #tpu.memory_space<vmem>>, %arg4: memref<4x128xf32, #tpu.memory_space<vmem>>) attributes {dimension_semantics = [#tpu.dimension_semantics<parallel>], iteration_bounds = array<i64: 1>, scalar_prefetch = 0 : i64, scratch_operands = 0 : i64, tpu.core_type = #tpu.core_type<tc>, window_params = [{transform_indices = @transform_0, window_bounds = array<i64: 4, 512>}, {pipeline_mode = #tpu.pipeline_mode<synchronous>, transform_indices = @transform_1, window_bounds = array<i64: 512, 128>}, {pipeline_mode = #tpu.pipeline_mode<synchronous>, transform_indices = @transform_2, window_bounds = array<i64: 1, 128>}, {transform_indices = @transform_3, window_bounds = array<i64: 4, 128>}]} {
    %c0 = arith.constant 0 : index
    %c0_0 = arith.constant 0 : index
    %0 = vector.load %arg1[%c0, %c0_0] : memref<4x512xf32, #tpu.memory_space<vmem>>, vector<4x512xf32>
    %c0_1 = arith.constant 0 : index
    %c0_2 = arith.constant 0 : index
    %1 = vector.load %arg2[%c0_1, %c0_2] : memref<512x128xf32, #tpu.memory_space<vmem>>, vector<512x128xf32>
    %cst = arith.constant dense<0.000000e+00> : vector<4x128xf32>
    %2 = tpu.matmul %0, %1, %cst {dimension_numbers = #tpu.dot_dimension_numbers<[1], [0], [0], [1], [0, 0, 1, 1], [], []>} : vector<4x512xf32>, vector<512x128xf32>, vector<4x128xf32> -> vector<4x128xf32>
    %c0_3 = arith.constant 0 : index
    %c0_4 = arith.constant 0 : index
    %3 = vector.load %arg3[%c0_3, %c0_4] : memref<1x128xf32, #tpu.memory_space<vmem>>, vector<1x128xf32>
    %4 = vector.broadcast %3 : vector<1x128xf32> to vector<4x128xf32>
    %5 = arith.addf %2, %4 : vector<4x128xf32>
    %c0_5 = arith.constant 0 : index
    %c0_6 = arith.constant 0 : index
    %6 = vector.load %arg4[%c0_5, %c0_6] : memref<4x128xf32, #tpu.memory_space<vmem>>, vector<4x128xf32>
    tpu.vector_store %arg4[%c0_5, %c0_6], %5 {strides = array<i32>} : memref<4x128xf32, #tpu.memory_space<vmem>>, vector<4x128xf32>,
    return
  }
  func.func @transform_0(%arg0: i32) -> (i32, i32) {
    %c0_i32 = arith.constant 0 : i32
    %c0_i32_0 = arith.constant 0 : i32
    return %arg0, %c0_i32 : i32, i32
  }
  func.func @transform_1(%arg0: i32) -> (i32, i32) {
    %c0_i32 = arith.constant 0 : i32
    %c0_i32_0 = arith.constant 0 : i32
    %c0_i32_1 = arith.constant 0 : i32
    return %c0_i32, %c0_i32_0 : i32, i32
  }
  func.func @transform_2(%arg0: i32) -> (i32, i32) {
    %c0_i32 = arith.constant 0 : i32
    %c0_i32_0 = arith.constant 0 : i32
    %c0_i32_1 = arith.constant 0 : i32
    return %c0_i32, %c0_i32_0 : i32, i32
  }
  func.func @transform_3(%arg0: i32) -> (i32, i32) {
    %c0_i32 = arith.constant 0 : i32
    %c0_i32_0 = arith.constant 0 : i32
    return %arg0, %c0_i32 : i32, i32
  }
}

</mosaic_0001>

<llo_original>
// kernel: tpu_custom_call.1
$region0: #{tpu_custom_call.1}
  #allocation0 [shape = 'u32[]', space=smem, size = 0x4, offset = 0x4, fixed_abs, tag = 'smem constant byte address 0x4 - core index']
  #allocation1 [shape = 'u32[144,128]{1,0:T(1,128)}', space=vmem, size = 0x12000, scoped, tag = 'internal scratch']
  %s0 = inlined_call_operand.hbm [shape: f32[4,512], index: 0, kind: input, shape index: {}]
  %s1 = inlined_call_operand.hbm [shape: f32[512,128], index: 1, kind: input, shape index: {}]
  %s2 = inlined_call_operand.vmem [shape: f32[1,128], index: 2, kind: input, shape index: {}]
  %s3 = inlined_call_operand.hbm [shape: f32[4,128], index: 3, kind: output, shape index: {}]
  %s4 = sld [smem:[#allocation0]]
  $region30: #{tpu_custom_call.1} parent=0
    _
  %s6 = ssub.s32 1, %s4
  %s7 = scalar_select 0, %s6, %s4
  $region1: #{tpu_custom_call.1} parent=0
    #allocation2 [shape = 'u8[8192]{0}', space=vmem, size = 0x2000, scoped, tag = 'input window, operand 0, single buffered']
    #allocation3 [shape = 's32[1]{0}', space=sflag, size = 0x4, scoped, tag = 'scoped memory for tpu_custom_call.1']
    #allocation4 [shape = 's32[1]{0}', space=sflag, size = 0x4, scoped, tag = 'scoped memory for tpu_custom_call.1']
    #allocation5 [shape = 'u8[262144]{0}', space=vmem, size = 0x40000, scoped, tag = 'input window, operand 1, single buffered']
    #allocation6 [shape = 's32[1]{0}', space=sflag, size = 0x4, scoped, tag = 'scoped memory for tpu_custom_call.1']
    #allocation7 [shape = 'u8[2048]{0}', space=vmem, size = 0x800, scoped, tag = 'output window, operand 0, single buffered']
    %8 = vsyncpa [#allocation3], 0
    %9 = vsyncpa [#allocation6], 0
    %10 = vsyncpa [#allocation4], 0
    // Predicated region
    $region2: #{tpu_custom_call.1} parent=1 // pred_check
      _
    $region3: #{tpu_custom_call.1} parent=1 // pred_check_branch
      %12 = sbr.rel (0) target = $region5
    $region4: #{tpu_custom_call.1} parent=1 // pred_region
      %s14 = ssub.s32 256, 256
      %15 = vsyncadd [#allocation3], %s14
      %s17 = sshll.u32 [#allocation2], 4
      %s18 = int_to_ptr.vmem [resolvable:$true] %s17
      %20 = dma.hbm_to_vmem [thread:$0]  %s0, 256, %s18, [#allocation3]
    $region5: #{tpu_custom_call.1} parent=1 // pred_fallthru
      _
    // Predicated region
    $region6: #{tpu_custom_call.1} parent=1 // pred_check
      _
    $region7: #{tpu_custom_call.1} parent=1 // pred_check_branch
      %22 = sbr.rel (0) target = $region9
    $region8: #{tpu_custom_call.1} parent=1 // pred_region
      %s24 = ssub.s32 8192, 8192
      %25 = vsyncadd [#allocation6], %s24
      %s26 = sshll.u32 [#allocation5], 4
      %s27 = int_to_ptr.vmem [resolvable:$true] %s26
      %32 = dma.hbm_to_vmem [thread:$0]  %s1, 8192, %s27, [#allocation6], 128, 128, 8
    $region9: #{tpu_custom_call.1} parent=1 // pred_fallthru
      _
    // Predicated region
    $region10: #{tpu_custom_call.1} parent=1 // pred_check
      _
    $region11: #{tpu_custom_call.1} parent=1 // pred_check_branch
      %34 = sbr.rel (0) target = $region13
    $region12: #{tpu_custom_call.1} parent=1 // pred_region
      _
    $region13: #{tpu_custom_call.1} parent=1 // pred_fallthru
      _
    // Predicated region
    $region14: #{tpu_custom_call.1} parent=1 // pred_check
      _
    $region15: #{tpu_custom_call.1} parent=1 // pred_check_branch
      %36 = sbr.rel (0) target = $region17
    $region16: #{tpu_custom_call.1} parent=1 // pred_region
      %37 = dma.done [#allocation3], 256
    $region17: #{tpu_custom_call.1} parent=1 // pred_fallthru
      _
    // Predicated region
    $region18: #{tpu_custom_call.1} parent=1 // pred_check
      _
    $region19: #{tpu_custom_call.1} parent=1 // pred_check_branch
      %39 = sbr.rel (0) target = $region21
    $region20: #{tpu_custom_call.1} parent=1 // pred_region
      %40 = dma.done [#allocation6], 8192
    $region21: #{tpu_custom_call.1} parent=1 // pred_fallthru
      _
    %v41 = vld [vmem:[#allocation2] sm:$0xff]
    %v42 = vld [vmem:[#allocation2 + $0x8] sm:$0xff]
    %v43 = vld [vmem:[#allocation5] sm:$0xff]
    %v44 = vld [vmem:[#allocation5 + $0x8] sm:$0xff]
    %v45 = vld [vmem:[#allocation5 + $0x10] sm:$0xff]
    %v46 = vld [vmem:[#allocation5 + $0x18] sm:$0xff]
    %v47 = vld [vmem:[#allocation5 + $0x20] sm:$0xff]
    %v48 = vld [vmem:[#allocation5 + $0x28] sm:$0xff]
    %v49 = vld [vmem:[#allocation5 + $0x30] sm:$0xff]
    %v50 = vld [vmem:[#allocation5 + $0x38] sm:$0xff]
    %v51 = vld [vmem:[#allocation5 + $0x40] sm:$0xff]
    %v52 = vld [vmem:[#allocation5 + $0x48] sm:$0xff]
    %v53 = vld [vmem:[#allocation5 + $0x50] sm:$0xff]
    %v54 = vld [vmem:[#allocation5 + $0x58] sm:$0xff]
    %v55 = vld [vmem:[#allocation5 + $0x60] sm:$0xff]
    %v56 = vld [vmem:[#allocation5 + $0x68] sm:$0xff]
    %v57 = vld [vmem:[#allocation5 + $0x70] sm:$0xff]
    %v58 = vld [vmem:[#allocation5 + $0x78] sm:$0xff]
    %v59 = vld [vmem:[#allocation5 + $0x80] sm:$0xff]
    %v60 = vld [vmem:[#allocation5 + $0x88] sm:$0xff]
    %v61 = vld [vmem:[#allocation5 + $0x90] sm:$0xff]
    %v62 = vld [vmem:[#allocation5 + $0x98] sm:$0xff]
    %v63 = vld [vmem:[#allocation5 + $0xa0] sm:$0xff]
    %v64 = vld [vmem:[#allocation5 + $0xa8] sm:$0xff]
    %v65 = vld [vmem:[#allocation5 + $0xb0] sm:$0xff]
    %v66 = vld [vmem:[#allocation5 + $0xb8] sm:$0xff]
    %v67 = vld [vmem:[#allocation5 + $0xc0] sm:$0xff]
    %v68 = vld [vmem:[#allocation5 + $0xc8] sm:$0xff]
    %v69 = vld [vmem:[#allocation5 + $0xd0] sm:$0xff]
    %v70 = vld [vmem:[#allocation5 + $0xd8] sm:$0xff]
    %v71 = vld [vmem:[#allocation5 + $0xe0] sm:$0xff]
    %v72 = vld [vmem:[#allocation5 + $0xe8] sm:$0xff]
    %v73 = vld [vmem:[#allocation5 + $0xf0] sm:$0xff]
    %v74 = vld [vmem:[#allocation5 + $0xf8] sm:$0xff]
    %v75 = vld [vmem:[#allocation5 + $0x100] sm:$0xff]
    %v76 = vld [vmem:[#allocation5 + $0x108] sm:$0xff]
    %v77 = vld [vmem:[#allocation5 + $0x110] sm:$0xff]
    %v78 = vld [vmem:[#allocation5 + $0x118] sm:$0xff]
    %v79 = vld [vmem:[#allocation5 + $0x120] sm:$0xff]
    %v80 = vld [vmem:[#allocation5 + $0x128] sm:$0xff]
    %v81 = vld [vmem:[#allocation5 + $0x130] sm:$0xff]
    %v82 = vld [vmem:[#allocation5 + $0x138] sm:$0xff]
    %v83 = vld [vmem:[#allocation5 + $0x140] sm:$0xff]
    %v84 = vld [vmem:[#allocation5 + $0x148] sm:$0xff]
    %v85 = vld [vmem:[#allocation5 + $0x150] sm:$0xff]
    %v86 = vld [vmem:[#allocation5 + $0x158] sm:$0xff]
    %v87 = vld [vmem:[#allocation5 + $0x160] sm:$0xff]
    %v88 = vld [vmem:[#allocation5 + $0x168] sm:$0xff]
    %v89 = vld [vmem:[#allocation5 + $0x170] sm:$0xff]
    %v90 = vld [vmem:[#allocation5 + $0x178] sm:$0xff]
    %v91 = vld [vmem:[#allocation5 + $0x180] sm:$0xff]
    %v92 = vld [vmem:[#allocation5 + $0x188] sm:$0xff]
    %v93 = vld [vmem:[#allocation5 + $0x190] sm:$0xff]
    %v94 = vld [vmem:[#allocation5 + $0x198] sm:$0xff]
    %v95 = vld [vmem:[#allocation5 + $0x1a0] sm:$0xff]
    %v96 = vld [vmem:[#allocation5 + $0x1a8] sm:$0xff]
    %v97 = vld [vmem:[#allocation5 + $0x1b0] sm:$0xff]
    %v98 = vld [vmem:[#allocation5 + $0x1b8] sm:$0xff]
    %v99 = vld [vmem:[#allocation5 + $0x1c0] sm:$0xff]
    %v100 = vld [vmem:[#allocation5 + $0x1c8] sm:$0xff]
    %v101 = vld [vmem:[#allocation5 + $0x1d0] sm:$0xff]
    %v102 = vld [vmem:[#allocation5 + $0x1d8] sm:$0xff]
    %v103 = vld [vmem:[#allocation5 + $0x1e0] sm:$0xff]
    %v104 = vld [vmem:[#allocation5 + $0x1e8] sm:$0xff]
    %v105 = vld [vmem:[#allocation5 + $0x1f0] sm:$0xff]
    %v106 = vld [vmem:[#allocation5 + $0x1f8] sm:$0xff]
    %v107 = vld [vmem:[%s2] sm:$0x1]
    %v109 = vlaneseq
    %v110 = vshrl.u32 %v109, 7
    %v111 = vsub.s32 0, %v110
    %v112 = vrot.slane %v107, %v111
    %v116 = vcombine.high %v41, %v41
    %v117 = vcombine.high %v42, %v42
    %120 = vmatprep.subr.mxu0 0.0
    %121 = vmatpush1.msra.mxu0 %v43
    %122 = vmatprep.subr.mxu0 0.0
    %123 = vmatpush1.msra.mxu0 %v44
    %124 = vmatprep.subr.mxu0 0.0
    %125 = vmatpush1.msra.mxu0 %v45
    %126 = vmatprep.subr.mxu0 0.0
    %127 = vmatpush1.msra.mxu0 %v46
    %128 = vmatprep.subr.mxu0 0.0
    %129 = vmatpush1.msra.mxu0 %v47
    %130 = vmatprep.subr.mxu0 0.0
    %131 = vmatpush1.msra.mxu0 %v48
    %132 = vmatprep.subr.mxu0 0.0
    %133 = vmatpush1.msra.mxu0 %v49
    %134 = vmatprep.subr.mxu0 0.0
    %135 = vmatpush1.msra.mxu0 %v50
    %136 = vmatprep.subr.mxu0 0.0
    %137 = vmatpush1.msra.mxu0 %v51
    %138 = vmatprep.subr.mxu0 0.0
    %139 = vmatpush1.msra.mxu0 %v52
    %140 = vmatprep.subr.mxu0 0.0
    %141 = vmatpush1.msra.mxu0 %v53
    %142 = vmatprep.subr.mxu0 0.0
    %143 = vmatpush1.msra.mxu0 %v54
    %144 = vmatprep.subr.mxu0 0.0
    %145 = vmatpush1.msra.mxu0 %v55
    %146 = vmatprep.subr.mxu0 0.0
    %147 = vmatpush1.msra.mxu0 %v56
    %148 = vmatprep.subr.mxu0 0.0
    %149 = vmatpush1.msra.mxu0 %v57
    %150 = vmatprep.subr.mxu0 0.0
    %151 = vmatpush1.msra.mxu0 %v58
    %152 = vmatprep.subr.mxu0 0.0
    %153 = vmatpush1.msra.mxu0 %v59
    %154 = vmatprep.subr.mxu0 0.0
    %155 = vmatpush1.msra.mxu0 %v60
    %156 = vmatprep.subr.mxu0 0.0
    %157 = vmatpush1.msra.mxu0 %v61
    %158 = vmatprep.subr.mxu0 0.0
    %159 = vmatpush1.msra.mxu0 %v62
    %160 = vmatprep.subr.mxu0 0.0
    %161 = vmatpush1.msra.mxu0 %v63
    %162 = vmatprep.subr.mxu0 0.0
    %163 = vmatpush1.msra.mxu0 %v64
    %164 = vmatprep.subr.mxu0 0.0
    %165 = vmatpush1.msra.mxu0 %v65
    %166 = vmatprep.subr.mxu0 0.0
    %167 = vmatpush1.msra.mxu0 %v66
    %168 = vmatprep.subr.mxu0 0.0
    %169 = vmatpush1.msra.mxu0 %v67
    %170 = vmatprep.subr.mxu0 0.0
    %171 = vmatpush1.msra.mxu0 %v68
    %172 = vmatprep.subr.mxu0 0.0
    %173 = vmatpush1.msra.mxu0 %v69
    %174 = vmatprep.subr.mxu0 0.0
    %175 = vmatpush1.msra.mxu0 %v70
    %176 = vmatprep.subr.mxu0 0.0
    %177 = vmatpush1.msra.mxu0 %v71
    %178 = vmatprep.subr.mxu0 0.0
    %179 = vmatpush1.msra.mxu0 %v72
    %180 = vmatprep.subr.mxu0 0.0
    %181 = vmatpush1.msra.mxu0 %v73
    %182 = vmatprep.subr.mxu0 0.0
    %183 = vmatpush1.msra.mxu0 %v74
    %184 = vmatprep.mubr.f32.mxu0 %v116
    %185 = vmatmul.mubr.f32.gmra.mrb[0].mxu0 %v41
    %v186 = vpop.f32.mrb[0].mxu0
    %v187 = vadd.f32 %v112, %v186
    %v188 = vpop.f32.mrb[0].mxu0
    %189 = vdwg.mxu0
    %190 = vmatprep.subr.mxu0 0.0
    %191 = vmatpush1.msra.mxu0 %v75
    %192 = vmatprep.subr.mxu0 0.0
    %193 = vmatpush1.msra.mxu0 %v76
    %194 = vmatprep.subr.mxu0 0.0
    %195 = vmatpush1.msra.mxu0 %v77
    %196 = vmatprep.subr.mxu0 0.0
    %197 = vmatpush1.msra.mxu0 %v78
    %198 = vmatprep.subr.mxu0 0.0
    %199 = vmatpush1.msra.mxu0 %v79
    %200 = vmatprep.subr.mxu0 0.0
    %201 = vmatpush1.msra.mxu0 %v80
    %202 = vmatprep.subr.mxu0 0.0
    %203 = vmatpush1.msra.mxu0 %v81
    %204 = vmatprep.subr.mxu0 0.0
    %205 = vmatpush1.msra.mxu0 %v82
    %206 = vmatprep.subr.mxu0 0.0
    %207 = vmatpush1.msra.mxu0 %v83
    %208 = vmatprep.subr.mxu0 0.0
    %209 = vmatpush1.msra.mxu0 %v84
    %210 = vmatprep.subr.mxu0 0.0
    %211 = vmatpush1.msra.mxu0 %v85
    %212 = vmatprep.subr.mxu0 0.0
    %213 = vmatpush1.msra.mxu0 %v86
    %214 = vmatprep.subr.mxu0 0.0
    %215 = vmatpush1.msra.mxu0 %v87
    %216 = vmatprep.subr.mxu0 0.0
    %217 = vmatpush1.msra.mxu0 %v88
    %218 = vmatprep.subr.mxu0 0.0
    %219 = vmatpush1.msra.mxu0 %v89
    %220 = vmatprep.subr.mxu0 0.0
    %221 = vmatpush1.msra.mxu0 %v90
    %222 = vmatprep.subr.mxu0 0.0
    %223 = vmatpush1.msra.mxu0 %v91
    %224 = vmatprep.subr.mxu0 0.0
    %225 = vmatpush1.msra.mxu0 %v92
    %226 = vmatprep.subr.mxu0 0.0
    %227 = vmatpush1.msra.mxu0 %v93
    %228 = vmatprep.subr.mxu0 0.0
    %229 = vmatpush1.msra.mxu0 %v94
    %230 = vmatprep.subr.mxu0 0.0
    %231 = vmatpush1.msra.mxu0 %v95
    %232 = vmatprep.subr.mxu0 0.0
    %233 = vmatpush1.msra.mxu0 %v96
    %234 = vmatprep.subr.mxu0 0.0
    %235 = vmatpush1.msra.mxu0 %v97
    %236 = vmatprep.subr.mxu0 0.0
    %237 = vmatpush1.msra.mxu0 %v98
    %238 = vmatprep.subr.mxu0 0.0
    %239 = vmatpush1.msra.mxu0 %v99
    %240 = vmatprep.subr.mxu0 0.0
    %241 = vmatpush1.msra.mxu0 %v100
    %242 = vmatprep.subr.mxu0 0.0
    %243 = vmatpush1.msra.mxu0 %v101
    %244 = vmatprep.subr.mxu0 0.0
    %245 = vmatpush1.msra.mxu0 %v102
    %246 = vmatprep.subr.mxu0 0.0
    %247 = vmatpush1.msra.mxu0 %v103
    %248 = vmatprep.subr.mxu0 0.0
    %249 = vmatpush1.msra.mxu0 %v104
    %250 = vmatprep.subr.mxu0 0.0
    %251 = vmatpush1.msra.mxu0 %v105
    %252 = vmatprep.subr.mxu0 0.0
    %253 = vmatpush1.msra.mxu0 %v106
    %254 = vmatprep.mubr.f32.mxu0 %v117
    %255 = vmatmul.mubr.f32.gmra.mrb[0].mxu0 %v42
    %v256 = vpop.f32.mrb[0].mxu0
    %v257 = vadd.f32 %v187, %v256
    %v258 = vpop.f32.mrb[0].mxu0
    %259 = vdwg.mxu0
    %260 = vst [vmem:[#allocation7] sm:$0xf] %v257
    // Predicated region
    $region22: #{tpu_custom_call.1} parent=1 // pred_check
      _
    $region23: #{tpu_custom_call.1} parent=1 // pred_check_branch
      %262 = sbr.rel (0) target = $region25
    $region24: #{tpu_custom_call.1} parent=1 // pred_region
      %s264 = ssub.s32 64, 64
      %265 = vsyncadd [#allocation4], %s264
      %s267 = sshll.u32 [#allocation7], 4
      %s268 = int_to_ptr.vmem [resolvable:$true] %s267
      %270 = dma.vmem_to_hbm [thread:$0]  %s268, 64, %s3, [#allocation4]
    $region25: #{tpu_custom_call.1} parent=1 // pred_fallthru
      _
    // Predicated region
    $region26: #{tpu_custom_call.1} parent=1 // pred_check
      _
    $region27: #{tpu_custom_call.1} parent=1 // pred_check_branch
      %272 = sbr.rel (0) target = $region29
    $region28: #{tpu_custom_call.1} parent=1 // pred_region
      %273 = dma.done [#allocation4], 64
    $region29: #{tpu_custom_call.1} parent=1 // pred_fallthru
      _
    %274 = vsyncpa [#allocation3], 1
    %275 = vsyncpa [#allocation6], 1
    %276 = vsyncpa [#allocation4], 1

</llo_original>
